<compile_context>
chip_gen: v7x
topology: tpu7x:2x2x1
jax: 0.10.0
libtpu: 0.0.40
codegen_flags: <defaults>
</compile_context>

<pallas_src>
import numpy as np
import jax
import jax.numpy as jnp
from jax import lax
from jax.experimental import pallas as pl
from jax.experimental.pallas import tpu as pltpu

# Emotion head sizes (the PyTorch source references a global EMOTION_DIMS).
EMOTION_DIMS = (4, 3, 6, 5)
NE = len(EMOTION_DIMS)
D_TOTAL = sum(EMOTION_DIMS)          # 18 real classes
PAD = 128                            # single lane-dense class slab width
NEG = -1e30                          # lane padding (exp underflows to 0)
TB_MAX = 512                         # batch tile (fits easily in VMEM on v5e/v6e/v7x)

assert D_TOTAL <= PAD


def _round_up(x, m):
    return (x + m - 1) // m * m


def _seg_bounds():
    bounds, start = [], 0
    for d in EMOTION_DIMS:
        bounds.append((start, start + d))
        start += d
    return tuple(bounds)


SEG_BOUNDS = _seg_bounds()


def _make_kernel(tb, batch):
    """Kernel over one batch tile: (tb, PAD) logits + (tb, NE) target lanes -> scalar partial."""

    def kernel(l_ref, t_ref, out_ref):
        l = l_ref[...]                                     # (tb, PAD) f32
        t = t_ref[...]                                     # (tb, NE)  i32 global lane idx
        lane = lax.broadcasted_iota(jnp.int32, (tb, PAD), 1)

        # Per-head max, broadcast back onto that head's lanes (static masks).
        m_bcast = jnp.zeros_like(l)
        m_rowsum = jnp.zeros((tb, 1), jnp.float32)
        masks = []
        for start, end in SEG_BOUNDS:
            mask = (lane >= start) & (lane < end)
            masks.append(mask)
            m_s = jnp.max(jnp.where(mask, l, NEG), axis=-1, keepdims=True)
            m_bcast = jnp.where(mask, m_s, m_bcast)
            m_rowsum = m_rowsum + m_s

        # One exp over the whole 128-lane tile (padding lanes underflow to 0).
        e = jnp.exp(l - m_bcast)

        # Sum of per-head log-sum-exp values per row.
        lse_rowsum = m_rowsum
        for mask in masks:
            ssum = jnp.sum(jnp.where(mask, e, 0.0), axis=-1, keepdims=True)
            lse_rowsum = lse_rowsum + jnp.log(ssum)

        # Gather the NE target logits per row via a lane selector (heads are
        # lane-disjoint, so the selector has exactly NE ones per valid row).
        sel = jnp.zeros_like(l)
        for s in range(NE):
            sel = sel + (lane == t[:, s:s + 1]).astype(jnp.float32)
        tgt_rowsum = jnp.sum(l * sel, axis=-1, keepdims=True)

        # Mask batch-padding rows against the true batch size.
        row = lax.broadcasted_iota(jnp.int32, (tb, 1), 0) + pl.program_id(0) * tb
        row_mask = (row < batch).astype(jnp.float32)

        out_ref[0, 0] = jnp.sum(row_mask * (lse_rowsum - tgt_rowsum))

    return kernel


def per_emotion_cross_entropy_loss(logits, targets):
    """JAX/Pallas equivalent of PerEmotionCrossEntropyLoss.forward (weights=None)."""
    B = logits.shape[0]
    assert logits.shape[1] == D_TOTAL and targets.shape == logits.shape

    tb = TB_MAX if B >= TB_MAX else _round_up(B, 8)
    pad_b = _round_up(B, tb)
    num_tiles = pad_b // tb

    # Single lane-dense logits slab [pad_b, 128]; one pad, no per-head slabs.
    lp = jnp.pad(logits.astype(jnp.float32),
                 ((0, pad_b - B), (0, PAD - D_TOTAL)),
                 constant_values=NEG)

    # Targets -> int32 global lane index of the one-hot class, per head.
    cols = []
    for start, end in SEG_BOUNDS:
        cols.append(jnp.argmax(targets[:, start:end], axis=1).astype(jnp.int32) + start)
    tgt_lane = jnp.stack(cols, axis=1)                       # (B, NE)
    tgt_lane = jnp.pad(tgt_lane, ((0, pad_b - B), (0, 0)), constant_values=0)

    partials = pl.pallas_call(
        _make_kernel(tb, B),
        out_shape=jax.ShapeDtypeStruct((num_tiles, 1), jnp.float32),
        grid=(num_tiles,),
        in_specs=[pl.BlockSpec((tb, PAD), lambda i: (i, 0)),
                  pl.BlockSpec((tb, NE), lambda i: (i, 0))],
        out_specs=pl.BlockSpec((1, 1), lambda i: (i, 0),
                               memory_space=pltpu.MemorySpace.SMEM),
        compiler_params=pltpu.CompilerParams(dimension_semantics=("parallel",)),
    )(lp, tgt_lane)

    return jnp.sum(partials) / (B * NE)


def _reference_loss(logits, targets):
    """Plain-JAX reference matching the PyTorch forward semantics."""
    total = 0.0
    start = 0
    for d in EMOTION_DIMS:
        seg_l = logits[:, start:start + d].astype(jnp.float32)
        seg_t = targets[:, start:start + d].astype(jnp.float32)
        idx = jnp.argmax(seg_t, axis=1)
        lse = jax.scipy.special.logsumexp(seg_l, axis=1)
        tgt = jnp.take_along_axis(seg_l, idx[:, None], axis=1)[:, 0]
        total = total + jnp.mean(lse - tgt)
        start += d
    return total / len(EMOTION_DIMS)


if __name__ == "__main__":
    key = jax.random.PRNGKey(0)
    B = 8
    d_total = D_TOTAL

    k_logits, k_idx = jax.random.split(key)
    logits = jax.random.normal(k_logits, (B, d_total), dtype=jnp.float32)

    # Build one-hot targets per emotion head, concatenated along the class axis.
    target_segments = []
    idx_keys = jax.random.split(k_idx, len(EMOTION_DIMS))
    for kk, d in zip(idx_keys, EMOTION_DIMS):
        cls = jax.random.randint(kk, (B,), 0, d)
        target_segments.append(jax.nn.one_hot(cls, d, dtype=jnp.float32))
    targets = jnp.concatenate(target_segments, axis=1)

    loss_fn = jax.jit(per_emotion_cross_entropy_loss)
    loss = jax.block_until_ready(loss_fn(logits, targets))

    ref = jax.block_until_ready(_reference_loss(logits, targets))
    assert jnp.allclose(loss, ref, rtol=1e-5, atol=1e-5), (loss, ref)

    print("KERNEL_OK")
</pallas_src>

<mosaic_0001>
module attributes {stable_mosaic.version = 11 : i64} {
  func.func @kernel(%arg0: i32, %arg1: memref<8x128xf32, #tpu.memory_space<vmem>>, %arg2: memref<8x4xi32, #tpu.memory_space<vmem>>, %arg3: memref<1x1xf32, #tpu.memory_space<smem>>) attributes {dimension_semantics = [#tpu.dimension_semantics<parallel>], iteration_bounds = array<i64: 1>, scalar_prefetch = 0 : i64, scratch_operands = 0 : i64, tpu.core_type = #tpu.core_type<tc>, window_params = [{transform_indices = @transform_0, window_bounds = array<i64: 8, 128>}, {transform_indices = @transform_1, window_bounds = array<i64: 8, 4>}, {transform_indices = @transform_2, window_bounds = array<i64: 1, 1>}]} {
    %c0 = arith.constant 0 : index
    %c0_0 = arith.constant 0 : index
    %0 = vector.load %arg1[%c0, %c0_0] : memref<8x128xf32, #tpu.memory_space<vmem>>, vector<8x128xf32>
    %c0_1 = arith.constant 0 : index
    %c0_2 = arith.constant 0 : index
    %1 = vector.load %arg2[%c0_1, %c0_2] : memref<8x4xi32, #tpu.memory_space<vmem>>, vector<8x4xi32>
    %2 = tpu.iota {dimensions = array<i32: 1>} : vector<8x128xi32>
    %cst = arith.constant 0.000000e+00 : f32
    %3 = vector.broadcast %cst : f32 to vector<8x128xf32>
    %cst_3 = arith.constant 0.000000e+00 : f32
    %4 = vector.broadcast %cst_3 : f32 to vector<8x1xf32>
    %c0_i32 = arith.constant 0 : i32
    %5 = vector.broadcast %c0_i32 : i32 to vector<8x128xi32>
    %6 = arith.cmpi sge, %2, %5 : vector<8x128xi32>
    %c4_i32 = arith.constant 4 : i32
    %7 = vector.broadcast %c4_i32 : i32 to vector<8x128xi32>
    %8 = arith.cmpi slt, %2, %7 : vector<8x128xi32>
    %9 = arith.andi %6, %8 : vector<8x128xi1>
    %cst_4 = arith.constant -1.000000e+30 : f32
    %10 = vector.broadcast %cst_4 : f32 to vector<8x128xf32>
    %11 = arith.select %9, %0, %10 : vector<8x128xi1>, vector<8x128xf32>
    %cst_5 = arith.constant dense<0xFF800000> : vector<8xf32>
    %12 = vector.multi_reduction <maximumf>, %11, %cst_5 [1] : vector<8x128xf32> to vector<8xf32>
    %13 = vector.shape_cast %12 : vector<8xf32> to vector<8x1xf32>
    %14 = vector.shape_cast %13 : vector<8x1xf32> to vector<8x1xf32>
    %15 = vector.broadcast %14 : vector<8x1xf32> to vector<8x128xf32>
    %16 = arith.select %9, %15, %3 : vector<8x128xi1>, vector<8x128xf32>
    %17 = arith.addf %4, %13 : vector<8x1xf32>
    %c4_i32_6 = arith.constant 4 : i32
    %18 = vector.broadcast %c4_i32_6 : i32 to vector<8x128xi32>
    %19 = arith.cmpi sge, %2, %18 : vector<8x128xi32>
    %c7_i32 = arith.constant 7 : i32
    %20 = vector.broadcast %c7_i32 : i32 to vector<8x128xi32>
    %21 = arith.cmpi slt, %2, %20 : vector<8x128xi32>
    %22 = arith.andi %19, %21 : vector<8x128xi1>
    %cst_7 = arith.constant -1.000000e+30 : f32
    %23 = vector.broadcast %cst_7 : f32 to vector<8x128xf32>
    %24 = arith.select %22, %0, %23 : vector<8x128xi1>, vector<8x128xf32>
    %cst_8 = arith.constant dense<0xFF800000> : vector<8xf32>
    %25 = vector.multi_reduction <maximumf>, %24, %cst_8 [1] : vector<8x128xf32> to vector<8xf32>
    %26 = vector.shape_cast %25 : vector<8xf32> to vector<8x1xf32>
    %27 = vector.shape_cast %26 : vector<8x1xf32> to vector<8x1xf32>
    %28 = vector.broadcast %27 : vector<8x1xf32> to vector<8x128xf32>
    %29 = arith.select %22, %28, %16 : vector<8x128xi1>, vector<8x128xf32>
    %30 = arith.addf %17, %26 : vector<8x1xf32>
    %c7_i32_9 = arith.constant 7 : i32
    %31 = vector.broadcast %c7_i32_9 : i32 to vector<8x128xi32>
    %32 = arith.cmpi sge, %2, %31 : vector<8x128xi32>
    %c13_i32 = arith.constant 13 : i32
    %33 = vector.broadcast %c13_i32 : i32 to vector<8x128xi32>
    %34 = arith.cmpi slt, %2, %33 : vector<8x128xi32>
    %35 = arith.andi %32, %34 : vector<8x128xi1>
    %cst_10 = arith.constant -1.000000e+30 : f32
    %36 = vector.broadcast %cst_10 : f32 to vector<8x128xf32>
    %37 = arith.select %35, %0, %36 : vector<8x128xi1>, vector<8x128xf32>
    %cst_11 = arith.constant dense<0xFF800000> : vector<8xf32>
    %38 = vector.multi_reduction <maximumf>, %37, %cst_11 [1] : vector<8x128xf32> to vector<8xf32>
    %39 = vector.shape_cast %38 : vector<8xf32> to vector<8x1xf32>
    %40 = vector.shape_cast %39 : vector<8x1xf32> to vector<8x1xf32>
    %41 = vector.broadcast %40 : vector<8x1xf32> to vector<8x128xf32>
    %42 = arith.select %35, %41, %29 : vector<8x128xi1>, vector<8x128xf32>
    %43 = arith.addf %30, %39 : vector<8x1xf32>
    %c13_i32_12 = arith.constant 13 : i32
    %44 = vector.broadcast %c13_i32_12 : i32 to vector<8x128xi32>
    %45 = arith.cmpi sge, %2, %44 : vector<8x128xi32>
    %c18_i32 = arith.constant 18 : i32
    %46 = vector.broadcast %c18_i32 : i32 to vector<8x128xi32>
    %47 = arith.cmpi slt, %2, %46 : vector<8x128xi32>
    %48 = arith.andi %45, %47 : vector<8x128xi1>
    %cst_13 = arith.constant -1.000000e+30 : f32
    %49 = vector.broadcast %cst_13 : f32 to vector<8x128xf32>
    %50 = arith.select %48, %0, %49 : vector<8x128xi1>, vector<8x128xf32>
    %cst_14 = arith.constant dense<0xFF800000> : vector<8xf32>
    %51 = vector.multi_reduction <maximumf>, %50, %cst_14 [1] : vector<8x128xf32> to vector<8xf32>
    %52 = vector.shape_cast %51 : vector<8xf32> to vector<8x1xf32>
    %53 = vector.shape_cast %52 : vector<8x1xf32> to vector<8x1xf32>
    %54 = vector.broadcast %53 : vector<8x1xf32> to vector<8x128xf32>
    %55 = arith.select %48, %54, %42 : vector<8x128xi1>, vector<8x128xf32>
    %56 = arith.addf %43, %52 : vector<8x1xf32>
    %57 = arith.subf %0, %55 : vector<8x128xf32>
    %58 = math.exp %57 : vector<8x128xf32>
    %cst_15 = arith.constant 0.000000e+00 : f32
    %59 = vector.broadcast %cst_15 : f32 to vector<8x128xf32>
    %60 = arith.select %9, %58, %59 : vector<8x128xi1>, vector<8x128xf32>
    %cst_16 = arith.constant dense<0.000000e+00> : vector<8xf32>
    %61 = vector.multi_reduction <add>, %60, %cst_16 [1] : vector<8x128xf32> to vector<8xf32>
    %62 = vector.shape_cast %61 : vector<8xf32> to vector<8x1xf32>
    %63 = math.log %62 : vector<8x1xf32>
    %64 = arith.addf %56, %63 : vector<8x1xf32>
    %cst_17 = arith.constant 0.000000e+00 : f32
    %65 = vector.broadcast %cst_17 : f32 to vector<8x128xf32>
    %66 = arith.select %22, %58, %65 : vector<8x128xi1>, vector<8x128xf32>
    %cst_18 = arith.constant dense<0.000000e+00> : vector<8xf32>
    %67 = vector.multi_reduction <add>, %66, %cst_18 [1] : vector<8x128xf32> to vector<8xf32>
    %68 = vector.shape_cast %67 : vector<8xf32> to vector<8x1xf32>
    %69 = math.log %68 : vector<8x1xf32>
    %70 = arith.addf %64, %69 : vector<8x1xf32>
    %cst_19 = arith.constant 0.000000e+00 : f32
    %71 = vector.broadcast %cst_19 : f32 to vector<8x128xf32>
    %72 = arith.select %35, %58, %71 : vector<8x128xi1>, vector<8x128xf32>
    %cst_20 = arith.constant dense<0.000000e+00> : vector<8xf32>
    %73 = vector.multi_reduction <add>, %72, %cst_20 [1] : vector<8x128xf32> to vector<8xf32>
    %74 = vector.shape_cast %73 : vector<8xf32> to vector<8x1xf32>
    %75 = math.log %74 : vector<8x1xf32>
    %76 = arith.addf %70, %75 : vector<8x1xf32>
    %cst_21 = arith.constant 0.000000e+00 : f32
    %77 = vector.broadcast %cst_21 : f32 to vector<8x128xf32>
    %78 = arith.select %48, %58, %77 : vector<8x128xi1>, vector<8x128xf32>
    %cst_22 = arith.constant dense<0.000000e+00> : vector<8xf32>
    %79 = vector.multi_reduction <add>, %78, %cst_22 [1] : vector<8x128xf32> to vector<8xf32>
    %80 = vector.shape_cast %79 : vector<8xf32> to vector<8x1xf32>
    %81 = math.log %80 : vector<8x1xf32>
    %82 = arith.addf %76, %81 : vector<8x1xf32>
    %cst_23 = arith.constant 0.000000e+00 : f32
    %83 = vector.broadcast %cst_23 : f32 to vector<8x128xf32>
    %84 = vector.extract_strided_slice %1 {offsets = [0, 0], sizes = [8, 1], strides = [1, 1]} : vector<8x4xi32> to vector<8x1xi32>
    %85 = vector.broadcast %84 : vector<8x1xi32> to vector<8x128xi32>
    %86 = arith.cmpi eq, %2, %85 : vector<8x128xi32>
    %87 = arith.extui %86 : vector<8x128xi1> to vector<8x128xi32>
    %88 = arith.sitofp %87 : vector<8x128xi32> to vector<8x128xf32>
    %89 = arith.addf %83, %88 : vector<8x128xf32>
    %90 = vector.extract_strided_slice %1 {offsets = [0, 1], sizes = [8, 1], strides = [1, 1]} : vector<8x4xi32> to vector<8x1xi32>
    %91 = vector.broadcast %90 : vector<8x1xi32> to vector<8x128xi32>
    %92 = arith.cmpi eq, %2, %91 : vector<8x128xi32>
    %93 = arith.extui %92 : vector<8x128xi1> to vector<8x128xi32>
    %94 = arith.sitofp %93 : vector<8x128xi32> to vector<8x128xf32>
    %95 = arith.addf %89, %94 : vector<8x128xf32>
    %96 = vector.extract_strided_slice %1 {offsets = [0, 2], sizes = [8, 1], strides = [1, 1]} : vector<8x4xi32> to vector<8x1xi32>
    %97 = vector.broadcast %96 : vector<8x1xi32> to vector<8x128xi32>
    %98 = arith.cmpi eq, %2, %97 : vector<8x128xi32>
    %99 = arith.extui %98 : vector<8x128xi1> to vector<8x128xi32>
    %100 = arith.sitofp %99 : vector<8x128xi32> to vector<8x128xf32>
    %101 = arith.addf %95, %100 : vector<8x128xf32>
    %102 = vector.extract_strided_slice %1 {offsets = [0, 3], sizes = [8, 1], strides = [1, 1]} : vector<8x4xi32> to vector<8x1xi32>
    %103 = vector.broadcast %102 : vector<8x1xi32> to vector<8x128xi32>
    %104 = arith.cmpi eq, %2, %103 : vector<8x128xi32>
    %105 = arith.extui %104 : vector<8x128xi1> to vector<8x128xi32>
    %106 = arith.sitofp %105 : vector<8x128xi32> to vector<8x128xf32>
    %107 = arith.addf %101, %106 : vector<8x128xf32>
    %108 = arith.mulf %0, %107 : vector<8x128xf32>
    %cst_24 = arith.constant dense<0.000000e+00> : vector<8xf32>
    %109 = vector.multi_reduction <add>, %108, %cst_24 [1] : vector<8x128xf32> to vector<8xf32>
    %110 = vector.shape_cast %109 : vector<8xf32> to vector<8x1xf32>
    %111 = tpu.iota {dimensions = array<i32: 0>} : vector<8x1xi32>
    %c8_i32 = arith.constant 8 : i32
    %112 = arith.muli %arg0, %c8_i32 : i32
    %113 = vector.broadcast %112 : i32 to vector<8x1xi32>
    %114 = arith.addi %111, %113 : vector<8x1xi32>
    %c8_i32_25 = arith.constant 8 : i32
    %115 = vector.broadcast %c8_i32_25 : i32 to vector<8x1xi32>
    %116 = arith.cmpi slt, %114, %115 : vector<8x1xi32>
    %117 = arith.extui %116 : vector<8x1xi1> to vector<8x1xi32>
    %118 = arith.sitofp %117 : vector<8x1xi32> to vector<8x1xf32>
    %119 = arith.subf %82, %110 : vector<8x1xf32>
    %120 = arith.mulf %118, %119 : vector<8x1xf32>
    %121 = vector.shape_cast %120 : vector<8x1xf32> to vector<1x8x1xf32>
    %cst_26 = arith.constant dense<0.000000e+00> : vector<1xf32>
    %122 = vector.multi_reduction <add>, %121, %cst_26 [1, 2] : vector<1x8x1xf32> to vector<1xf32>
    %123 = vector.shape_cast %122 : vector<1xf32> to vector<1x1x1xf32>
    %124 = vector.extract %123[0, 0, 0] : f32 from vector<1x1x1xf32>
    %c0_27 = arith.constant 0 : index
    %c0_28 = arith.constant 0 : index
    %125 = memref.load %arg3[%c0_27, %c0_28] : memref<1x1xf32, #tpu.memory_space<smem>>
    memref.store %124, %arg3[%c0_27, %c0_28] : memref<1x1xf32, #tpu.memory_space<smem>>
    return
  }
  func.func @transform_0(%arg0: i32) -> (i32, i32) {
    %c0_i32 = arith.constant 0 : i32
    %c0_i32_0 = arith.constant 0 : i32
    return %arg0, %c0_i32 : i32, i32
  }
  func.func @transform_1(%arg0: i32) -> (i32, i32) {
    %c0_i32 = arith.constant 0 : i32
    %c0_i32_0 = arith.constant 0 : i32
    return %arg0, %c0_i32 : i32, i32
  }
  func.func @transform_2(%arg0: i32) -> (i32, i32) {
    %c0_i32 = arith.constant 0 : i32
    %c0_i32_0 = arith.constant 0 : i32
    return %arg0, %c0_i32 : i32, i32
  }
}

</mosaic_0001>

<llo_original>
// kernel: per_emotion_cross_entropy_loss.1
$region0: #{per_emotion_cross_entropy_loss.1}
  #allocation0 [shape = 'u32[]', space=smem, size = 0x4, offset = 0x4, fixed_abs, tag = 'smem constant byte address 0x4 - core index']
  #allocation1 [shape = 'u32[144,128]{1,0:T(1,128)}', space=vmem, size = 0x12000, scoped, tag = 'internal scratch']
  %s0 = inlined_call_operand.vmem [shape: f32[8,128], index: 0, kind: input, shape index: {}]
  %s1 = inlined_call_operand.vmem [shape: s32[8,4], index: 1, kind: input, shape index: {}]
  %s2 = inlined_call_operand.hbm [shape: f32[1,1], index: 2, kind: output, shape index: {}]
  %s3 = sld [smem:[#allocation0]]
  $region18: #{per_emotion_cross_entropy_loss.1} parent=0
    _
  %s5 = ssub.s32 1, %s3
  %s6 = scalar_select 0, %s5, %s3
  $region1: #{per_emotion_cross_entropy_loss.1} parent=0
    #allocation2 [shape = 'u8[512]{0}', space=smem, size = 0x200, scoped, tag = 'output window, operand 0, single buffered']
    #allocation3 [shape = 's32[1]{0}', space=sflag, size = 0x4, scoped, tag = 'scoped memory for per_emotion_cross_entropy_loss.1']
    %7 = vsyncpa [#allocation3], 0
    // Predicated region
    $region2: #{per_emotion_cross_entropy_loss.1} parent=1 // pred_check
      _
    $region3: #{per_emotion_cross_entropy_loss.1} parent=1 // pred_check_branch
      %9 = sbr.rel (0) target = $region5
    $region4: #{per_emotion_cross_entropy_loss.1} parent=1 // pred_region
      _
    $region5: #{per_emotion_cross_entropy_loss.1} parent=1 // pred_fallthru
      _
    // Predicated region
    $region6: #{per_emotion_cross_entropy_loss.1} parent=1 // pred_check
      _
    $region7: #{per_emotion_cross_entropy_loss.1} parent=1 // pred_check_branch
      %11 = sbr.rel (0) target = $region9
    $region8: #{per_emotion_cross_entropy_loss.1} parent=1 // pred_region
      _
    $region9: #{per_emotion_cross_entropy_loss.1} parent=1 // pred_fallthru
      _
    %v12 = vld [vmem:[%s0] sm:$0xff]
    %v13 = vld [vmem:[%s1] sm:$0xff]
    %v14 = vlaneseq
    %v15 = vand.u32 %v14, 127
    %vm16 = vcmp.ge.s32.totalorder %v15, 0
    %vm17 = vcmp.lt.s32.totalorder %v15, 4
    %vm18 = vmand %vm16, %vm17
    %v19 = vsel %vm18, %v12, -1e+30
    %20 = vmax.xlane.f32.xlu0 %v19
    %v21 = vpop.xlane.xlu0 %20
    %v22 = vsel %vm18, %v21, 0.0
    %v23 = vadd.f32 %v21, 0.0
    %vm24 = vcmp.ge.s32.totalorder %v15, 4
    %vm25 = vcmp.lt.s32.totalorder %v15, 7
    %vm26 = vmand %vm24, %vm25
    %v27 = vsel %vm26, %v12, -1e+30
    %28 = vmax.xlane.f32.xlu0 %v27
    %v29 = vpop.xlane.xlu0 %28
    %v30 = vsel %vm26, %v29, %v22
    %v31 = vadd.f32 %v23, %v29
    %vm32 = vcmp.ge.s32.totalorder %v15, 7
    %vm33 = vcmp.lt.s32.totalorder %v15, 13
    %vm34 = vmand %vm32, %vm33
    %v35 = vsel %vm34, %v12, -1e+30
    %36 = vmax.xlane.f32.xlu0 %v35
    %v37 = vpop.xlane.xlu0 %36
    %v38 = vsel %vm34, %v37, %v30
    %v39 = vadd.f32 %v31, %v37
    %vm40 = vcmp.ge.s32.totalorder %v15, 13
    %vm41 = vcmp.lt.s32.totalorder %v15, 18
    %vm42 = vmand %vm40, %vm41
    %v43 = vsel %vm42, %v12, -1e+30
    %44 = vmax.xlane.f32.xlu0 %v43
    %v45 = vpop.xlane.xlu0 %44
    %v46 = vsel %vm42, %v45, %v38
    %v47 = vadd.f32 %v39, %v45
    %v48 = vsub.f32 %v12, %v46
    %v49 = vmul.f32 %v48, 1.442695
    %v50 = vpow.pop %v49
    %v51 = vsel %vm18, %v50, 0.0
    %52 = vadd.xlane.f32.xlu0 %v51
    %v53 = vpop.xlane.xlu0 %52
    %v54 = vlog2.pop %v53
    %v55 = vmul.f32 %v54, 0.6931472
    %v56 = vadd.f32 %v47, %v55
    %v57 = vsel %vm26, %v50, 0.0
    %58 = vadd.xlane.f32.xlu0 %v57
    %v59 = vpop.xlane.xlu0 %58
    %v60 = vlog2.pop %v59
    %v61 = vmul.f32 %v60, 0.6931472
    %v62 = vadd.f32 %v56, %v61
    %v63 = vsel %vm34, %v50, 0.0
    %64 = vadd.xlane.f32.xlu0 %v63
    %v65 = vpop.xlane.xlu0 %64
    %v66 = vlog2.pop %v65
    %v67 = vmul.f32 %v66, 0.6931472
    %v68 = vadd.f32 %v62, %v67
    %v69 = vsel %vm42, %v50, 0.0
    %70 = vadd.xlane.f32.xlu0 %v69
    %v71 = vpop.xlane.xlu0 %70
    %v72 = vlog2.pop %v71
    %v73 = vmul.f32 %v72, 0.6931472
    %v74 = vadd.f32 %v68, %v73
    %75 = vset.pattern.permute.xlu0 0
    %76 = vperm.xlu0 %75, %v13
    %v77 = vpop.permute.xlu0 %76
    %vm78 = vcmp.eq.s32.totalorder %v15, %v77
    %v79 = vsel %vm78, 1, 0
    %v80 = vcvt.s32.f32 %v79
    %v81 = vadd.f32 %v80, 0.0
    %82 = vset.pattern.permute.xlu0 1
    %83 = vperm.xlu0 %82, %v13
    %v84 = vpop.permute.xlu0 %83
    %vm85 = vcmp.eq.s32.totalorder %v15, %v84
    %v86 = vsel %vm85, 1, 0
    %v87 = vcvt.s32.f32 %v86
    %v88 = vadd.f32 %v81, %v87
    %89 = vset.pattern.permute.xlu0 2
    %90 = vperm.xlu0 %89, %v13
    %v91 = vpop.permute.xlu0 %90
    %vm92 = vcmp.eq.s32.totalorder %v15, %v91
    %v93 = vsel %vm92, 1, 0
    %v94 = vcvt.s32.f32 %v93
    %v95 = vadd.f32 %v88, %v94
    %96 = vset.pattern.permute.xlu0 3
    %97 = vperm.xlu0 %96, %v13
    %v98 = vpop.permute.xlu0 %97
    %vm99 = vcmp.eq.s32.totalorder %v15, %v98
    %v100 = vsel %vm99, 1, 0
    %v101 = vcvt.s32.f32 %v100
    %v102 = vadd.f32 %v95, %v101
    %v103 = vmul.f32 %v12, %v102
    %104 = vadd.xlane.f32.xlu0 %v103
    %v105 = vpop.xlane.xlu0 %104
    %v106 = vlaneseq
    %v107 = vshrl.u32 %v106, 7
    %s108 = smul.u32 0, 8
    %v109 = vstv %s108
    %v110 = vadd.s32 %v107, %v109
    %vm111 = vcmp.lt.s32.totalorder %v110, 8
    %v112 = vsel %vm111, 1, 0
    %v113 = vcvt.s32.f32 %v112
    %v114 = vsub.f32 %v74, %v105
    %v115 = vmul.f32 %v113, %v114
    %vm116 = vcmask 7168
    %v117 = vsel %vm116, %v115, 0.0
    %118 = vadd.xlane.f32.xlu0 %v117
    %v119 = vpop.xlane.xlu0 %118
    %v120 = vrot.slane %v119, 4
    %v121 = vadd.f32 %v119, %v120
    %v122 = vrot.slane %v121, 2
    %v123 = vadd.f32 %v121, %v122
    %v124 = vrot.slane %v123, 1
    %v125 = vadd.f32 %v123, %v124
    %s126 = vtos %v125
    %s127 = scalar_lea.smem [#allocation2], 0
    %128 = sst [smem:[%s127]] %s126
    // Predicated region
    $region10: #{per_emotion_cross_entropy_loss.1} parent=1 // pred_check
      _
    $region11: #{per_emotion_cross_entropy_loss.1} parent=1 // pred_check_branch
      %130 = sbr.rel (0) target = $region13
    $region12: #{per_emotion_cross_entropy_loss.1} parent=1 // pred_region
      %s132 = ssub.s32 16, 16
      %133 = vsyncadd [#allocation3], %s132
      %136 = dma.smem_to_hbm [#allocation2], 16, %s2, [#allocation3]
    $region13: #{per_emotion_cross_entropy_loss.1} parent=1 // pred_fallthru
      _
    // Predicated region
    $region14: #{per_emotion_cross_entropy_loss.1} parent=1 // pred_check
      _
    $region15: #{per_emotion_cross_entropy_loss.1} parent=1 // pred_check_branch
      %138 = sbr.rel (0) target = $region17
    $region16: #{per_emotion_cross_entropy_loss.1} parent=1 // pred_region
      %139 = dma.done [#allocation3], 16
    $region17: #{per_emotion_cross_entropy_loss.1} parent=1 // pred_fallthru
      _
    %140 = sfence
    %141 = vsyncpa [#allocation3], 1

</llo_original>
